<compile_context>
chip_gen: v5e
topology: v5e:2x2
jax: 0.10.0
libtpu: 0.0.40
codegen_flags: <defaults>
</compile_context>

<pallas_src>
import math

import jax
import jax.numpy as jnp
import numpy as np
from jax.experimental import pallas as pl
from jax.experimental.pallas import tpu as pltpu


def _sigmoid(x):
    # logistic nonlinearity (the only one implemented in the reference module)
    return 1.0 / (1.0 + jnp.exp(-x))


def _round_up(x, m):
    return ((x + m - 1) // m) * m


def _pick_time_chunk(seq_len, rec_step, cap=32):
    """Largest multiple of rec_step that divides seq_len and is <= max(cap, rec_step)."""
    best = rec_step
    t = rec_step
    limit = max(cap, rec_step)
    while t <= seq_len:
        if seq_len % t == 0 and t <= limit:
            best = t
        t += rec_step
    return best


def make_rnn_kernel(dt_tau: float, time_chunk: int, rec_step: int):
    leak = 1.0 - dt_tau

    def kernel(drive_ref, wt_ref, h0_ref, rates_ref, h_scr, r_scr):
        ti = pl.program_id(1)  # time-chunk index (innermost, sequential recurrence)

        # Initialize the carried state at the first time chunk of each batch chunk.
        @pl.when(ti == 0)
        def _():
            h0 = h0_ref[...]
            h_scr[...] = h0
            r_scr[...] = _sigmoid(h0)

        w_t = wt_ref[...]              # (N_pad, N_pad) bf16, already |wrec|*mask, transposed
        h = h_scr[...]                 # (b_chunk, N_pad) f32
        r = r_scr[...]                 # sigmoid(h), cached from previous step/chunk

        # Statically unrolled inner time loop (time_chunk is small).
        for t in range(time_chunk):
            rec = jnp.dot(r.astype(jnp.bfloat16), w_t,
                          preferred_element_type=jnp.float32)
            # drive already contains dt_tau*x + sqrt(dt_tau)*noise_std*noise
            h = leak * h + dt_tau * rec + drive_ref[t]
            r = _sigmoid(h)
            if t % rec_step == rec_step - 1:          # static condition
                rates_ref[t // rec_step] = r          # static index, lane-dense store

        h_scr[...] = h
        r_scr[...] = r

    return kernel


def rnn_forward(x, h_init, wrec, mask, noise, *, noise_std, dt, tau, rec_step,
                time_chunk=None):
    """x, noise: (batch, seq, dim_rec); h_init: (batch, dim_rec).
    Returns rates: (batch, seq // rec_step, dim_rec)."""
    B, S, N = x.shape
    assert noise.shape == (B, S, N) and h_init.shape == (B, N)
    assert S % rec_step == 0, "seq_len must be a multiple of rec_step"
    rec_seq = S // rec_step
    dt_tau = float(dt) / float(tau)

    # ---- loop-invariant precompute (hoisted out of the kernel) --------------
    # Effective recurrent weights, pre-transposed so the kernel does r @ W_T.
    w_t = (jnp.abs(wrec.astype(jnp.float32)) * mask.astype(jnp.float32)).T
    # Fused external drive: one input stream instead of two.
    drive = (dt_tau * x.astype(jnp.float32)
             + (math.sqrt(dt_tau) * noise_std) * noise.astype(jnp.float32))
    drive = jnp.transpose(drive, (1, 0, 2))          # time-major (S, B, N)

    # ---- pad to TPU-friendly (8, 128) tiles ---------------------------------
    B_pad = _round_up(B, 8)
    N_pad = _round_up(N, 128)
    drive = jnp.pad(drive, ((0, 0), (0, B_pad - B), (0, N_pad - N)))
    h0 = jnp.pad(h_init.astype(jnp.float32), ((0, B_pad - B), (0, N_pad - N)))
    w_t = jnp.pad(w_t, ((0, N_pad - N), (0, N_pad - N))).astype(jnp.bfloat16)

    # ---- time chunking ------------------------------------------------------
    T = time_chunk if time_chunk is not None else _pick_time_chunk(S, rec_step)
    assert S % T == 0 and T % rec_step == 0
    n_tchunks = S // T

    # Batch chunking: shard batch across TensorCores (v7x megacore) when the
    # padded batch is large enough; otherwise a single chunk.
    b_chunk = B_pad // 2 if (B_pad % 16 == 0) else B_pad
    n_bchunks = B_pad // b_chunk

    # ---- VMEM budget (double-buffered blocks + resident weights + scratch) --
    vmem_bytes = (
        2 * T * b_chunk * N_pad * 4                    # drive blocks
        + 2 * (T // rec_step) * b_chunk * N_pad * 4    # rates blocks
        + 2 * N_pad * N_pad * 2                        # W_T (bf16)
        + 2 * b_chunk * N_pad * 4                      # h0 blocks
        + 2 * b_chunk * N_pad * 4                      # h, r scratch
    )
    vmem_limit = int(min(64 * 1024 * 1024, max(2 * vmem_bytes, 4 * 1024 * 1024)))

    kernel = make_rnn_kernel(dt_tau, T, rec_step)

    rates_t = pl.pallas_call(
        kernel,
        out_shape=jax.ShapeDtypeStruct((rec_seq, B_pad, N_pad), jnp.float32),
        grid_spec=pltpu.PrefetchScalarGridSpec(
            num_scalar_prefetch=0,
            grid=(n_bchunks, n_tchunks),
            in_specs=[
                pl.BlockSpec((T, b_chunk, N_pad), lambda bi, ti: (ti, bi, 0)),   # drive
                pl.BlockSpec((N_pad, N_pad), lambda bi, ti: (0, 0)),             # W_eff^T (resident)
                pl.BlockSpec((b_chunk, N_pad), lambda bi, ti: (bi, 0)),          # h_init
            ],
            out_specs=pl.BlockSpec((T // rec_step, b_chunk, N_pad),
                                   lambda bi, ti: (ti, bi, 0)),
            scratch_shapes=[pltpu.VMEM((b_chunk, N_pad), jnp.float32),   # carried h
                            pltpu.VMEM((b_chunk, N_pad), jnp.float32)],  # carried sigmoid(h)
        ),
        compiler_params=pltpu.CompilerParams(
            dimension_semantics=("parallel", "arbitrary"),   # batch parallel, time sequential
            vmem_limit_bytes=vmem_limit,
        ),
    )(drive, w_t, h0)

    # back to batch-major, strip padding
    return jnp.transpose(rates_t, (1, 0, 2))[:B, :, :N]


def rnn_reference(x, h_init, wrec, mask, noise, *, noise_std, dt, tau, rec_step):
    """Pure-JAX reference mirroring the PyTorch loop exactly (all f32)."""
    B, S, N = x.shape
    dt_tau = dt / tau
    w_eff = jnp.abs(wrec) * mask
    h = h_init
    rates = []
    for i in range(S):
        rec_input = _sigmoid(h) @ w_eff.T + x[:, i, :]
        h = ((1.0 - dt_tau) * h + dt_tau * rec_input
             + math.sqrt(dt_tau) * noise_std * noise[:, i, :])
        if i % rec_step == rec_step - 1:
            rates.append(_sigmoid(h))
    return jnp.stack(rates, axis=1)


if __name__ == "__main__":
    # Small, module-consistent shapes.
    batch, seq_len, dim_rec = 2, 8, 32
    rec_step = 2
    noise_std = 0.1
    dt, tau, g = 0.1, 1.0, 1.5

    # Dale's-law signature: 3/4 excitatory (+1), 1/4 inhibitory (-1).
    signature = np.ones(dim_rec, dtype=np.float32)
    signature[3 * dim_rec // 4:] = -1.0
    mask_EI = np.tile(signature, (dim_rec, 1))
    np.fill_diagonal(mask_EI, 0.0)
    mask = jnp.asarray(mask_EI * 1.0, dtype=jnp.float32)  # Mask_connections = 1.0

    key = jax.random.PRNGKey(0)
    k_w, k_x, k_h, k_n = jax.random.split(key, 4)

    # Deterministic parameter init: wrec ~ N(0, (g/sqrt(dim_rec))^2)
    wrec = (g / math.sqrt(dim_rec)) * jax.random.normal(k_w, (dim_rec, dim_rec),
                                                        dtype=jnp.float32)
    x = 0.5 * jax.random.normal(k_x, (batch, seq_len, dim_rec), dtype=jnp.float32)
    h_init = 0.1 * jax.random.normal(k_h, (batch, dim_rec), dtype=jnp.float32)
    # Noise is drawn up-front (matches torch.randn(batch, seq, dim_rec)) and fed
    # to the kernel so the computation is deterministic.
    noise = jax.random.normal(k_n, (batch, seq_len, dim_rec), dtype=jnp.float32)

    rates = rnn_forward(x, h_init, wrec, mask, noise,
                        noise_std=noise_std, dt=dt, tau=tau, rec_step=rec_step)
    rates = jax.block_until_ready(rates)

    rates_ref = rnn_reference(x, h_init, wrec, mask, noise,
                              noise_std=noise_std, dt=dt, tau=tau, rec_step=rec_step)

    assert rates.shape == (batch, seq_len // rec_step, dim_rec), rates.shape
    # bf16 MXU operands (f32 accumulate) vs pure-f32 reference -> slightly
    # relaxed tolerance.
    assert jnp.allclose(rates, rates_ref, atol=5e-3, rtol=5e-3), (
        float(jnp.max(jnp.abs(rates - rates_ref))))

    print("KERNEL_OK")
</pallas_src>

<mosaic_0001>
module attributes {stable_mosaic.version = 11 : i64} {
  func.func @kernel(%arg0: i32, %arg1: i32, %arg2: memref<8x8x128xf32, #tpu.memory_space<vmem>>, %arg3: memref<128x128xbf16, #tpu.memory_space<vmem>>, %arg4: memref<8x128xf32, #tpu.memory_space<vmem>>, %arg5: memref<4x8x128xf32, #tpu.memory_space<vmem>>, %arg6: memref<8x128xf32, #tpu.memory_space<vmem>>, %arg7: memref<8x128xf32, #tpu.memory_space<vmem>>) attributes {dimension_semantics = [#tpu.dimension_semantics<parallel>, #tpu.dimension_semantics<arbitrary>], iteration_bounds = array<i64: 1, 1>, scalar_prefetch = 0 : i64, scratch_operands = 2 : i64, tpu.core_type = #tpu.core_type<tc>, window_params = [{transform_indices = @transform_0, window_bounds = array<i64: 8, 8, 128>}, {pipeline_mode = #tpu.pipeline_mode<synchronous>, transform_indices = @transform_1, window_bounds = array<i64: 128, 128>}, {transform_indices = @transform_2, window_bounds = array<i64: 8, 128>}, {transform_indices = @transform_3, window_bounds = array<i64: 4, 8, 128>}]} {
    %c0_i32 = arith.constant 0 : i32
    %0 = arith.cmpi eq, %arg1, %c0_i32 : i32
    %1 = arith.extui %0 : i1 to i32
    %c0_i32_0 = arith.constant 0 : i32
    %2 = arith.cmpi ne, %1, %c0_i32_0 : i32
    scf.if %2 {
      %c0_86 = arith.constant 0 : index
      %c0_87 = arith.constant 0 : index
      %156 = vector.load %arg4[%c0_86, %c0_87] : memref<8x128xf32, #tpu.memory_space<vmem>>, vector<8x128xf32>
      %c0_88 = arith.constant 0 : index
      %c0_89 = arith.constant 0 : index
      %157 = vector.load %arg6[%c0_88, %c0_89] : memref<8x128xf32, #tpu.memory_space<vmem>>, vector<8x128xf32>
      tpu.vector_store %arg6[%c0_88, %c0_89], %156 {strides = array<i32>} : memref<8x128xf32, #tpu.memory_space<vmem>>, vector<8x128xf32>,
      %cst_90 = arith.constant 0.000000e+00 : f32
      %158 = vector.broadcast %cst_90 : f32 to vector<8x128xf32>
      %159 = arith.subf %158, %156 : vector<8x128xf32>
      %160 = math.exp %159 : vector<8x128xf32>
      %cst_91 = arith.constant 1.000000e+00 : f32
      %161 = vector.broadcast %cst_91 : f32 to vector<8x128xf32>
      %162 = arith.addf %161, %160 : vector<8x128xf32>
      %cst_92 = arith.constant 1.000000e+00 : f32
      %163 = vector.broadcast %cst_92 : f32 to vector<8x128xf32>
      %164 = arith.divf %163, %162 : vector<8x128xf32>
      %c0_93 = arith.constant 0 : index
      %c0_94 = arith.constant 0 : index
      %165 = vector.load %arg7[%c0_93, %c0_94] : memref<8x128xf32, #tpu.memory_space<vmem>>, vector<8x128xf32>
      tpu.vector_store %arg7[%c0_93, %c0_94], %164 {strides = array<i32>} : memref<8x128xf32, #tpu.memory_space<vmem>>, vector<8x128xf32>,
    } else {
    }
    %c0 = arith.constant 0 : index
    %c0_1 = arith.constant 0 : index
    %3 = vector.load %arg3[%c0, %c0_1] : memref<128x128xbf16, #tpu.memory_space<vmem>>, vector<128x128xbf16>
    %c0_2 = arith.constant 0 : index
    %c0_3 = arith.constant 0 : index
    %4 = vector.load %arg6[%c0_2, %c0_3] : memref<8x128xf32, #tpu.memory_space<vmem>>, vector<8x128xf32>
    %c0_4 = arith.constant 0 : index
    %c0_5 = arith.constant 0 : index
    %5 = vector.load %arg7[%c0_4, %c0_5] : memref<8x128xf32, #tpu.memory_space<vmem>>, vector<8x128xf32>
    %6 = arith.truncf %5 : vector<8x128xf32> to vector<8x128xbf16>
    %cst = arith.constant dense<0.000000e+00> : vector<8x128xf32>
    %7 = tpu.matmul %6, %3, %cst {dimension_numbers = #tpu.dot_dimension_numbers<[1], [0], [0], [1], [0, 0, 1, 1], [], []>} : vector<8x128xbf16>, vector<128x128xbf16>, vector<8x128xf32> -> vector<8x128xf32>
    %cst_6 = arith.constant 0.899999976 : f32
    %8 = vector.broadcast %cst_6 : f32 to vector<8x128xf32>
    %9 = arith.mulf %8, %4 : vector<8x128xf32>
    %cst_7 = arith.constant 1.000000e-01 : f32
    %10 = vector.broadcast %cst_7 : f32 to vector<8x128xf32>
    %11 = arith.mulf %10, %7 : vector<8x128xf32>
    %12 = arith.addf %9, %11 : vector<8x128xf32>
    %c0_8 = arith.constant 0 : index
    %c0_9 = arith.constant 0 : index
    %c0_10 = arith.constant 0 : index
    %13 = vector.load %arg2[%c0_8, %c0_9, %c0_10] : memref<8x8x128xf32, #tpu.memory_space<vmem>>, vector<1x8x128xf32>
    %14 = vector.shape_cast %13 : vector<1x8x128xf32> to vector<8x128xf32>
    %15 = arith.addf %12, %14 : vector<8x128xf32>
    %cst_11 = arith.constant 0.000000e+00 : f32
    %16 = vector.broadcast %cst_11 : f32 to vector<8x128xf32>
    %17 = arith.subf %16, %15 : vector<8x128xf32>
    %18 = math.exp %17 : vector<8x128xf32>
    %cst_12 = arith.constant 1.000000e+00 : f32
    %19 = vector.broadcast %cst_12 : f32 to vector<8x128xf32>
    %20 = arith.addf %19, %18 : vector<8x128xf32>
    %cst_13 = arith.constant 1.000000e+00 : f32
    %21 = vector.broadcast %cst_13 : f32 to vector<8x128xf32>
    %22 = arith.divf %21, %20 : vector<8x128xf32>
    %23 = arith.truncf %22 : vector<8x128xf32> to vector<8x128xbf16>
    %cst_14 = arith.constant dense<0.000000e+00> : vector<8x128xf32>
    %24 = tpu.matmul %23, %3, %cst_14 {dimension_numbers = #tpu.dot_dimension_numbers<[1], [0], [0], [1], [0, 0, 1, 1], [], []>} : vector<8x128xbf16>, vector<128x128xbf16>, vector<8x128xf32> -> vector<8x128xf32>
    %cst_15 = arith.constant 0.899999976 : f32
    %25 = vector.broadcast %cst_15 : f32 to vector<8x128xf32>
    %26 = arith.mulf %25, %15 : vector<8x128xf32>
    %cst_16 = arith.constant 1.000000e-01 : f32
    %27 = vector.broadcast %cst_16 : f32 to vector<8x128xf32>
    %28 = arith.mulf %27, %24 : vector<8x128xf32>
    %29 = arith.addf %26, %28 : vector<8x128xf32>
    %c1 = arith.constant 1 : index
    %c0_17 = arith.constant 0 : index
    %c0_18 = arith.constant 0 : index
    %30 = vector.load %arg2[%c1, %c0_17, %c0_18] : memref<8x8x128xf32, #tpu.memory_space<vmem>>, vector<1x8x128xf32>
    %31 = vector.shape_cast %30 : vector<1x8x128xf32> to vector<8x128xf32>
    %32 = arith.addf %29, %31 : vector<8x128xf32>
    %cst_19 = arith.constant 0.000000e+00 : f32
    %33 = vector.broadcast %cst_19 : f32 to vector<8x128xf32>
    %34 = arith.subf %33, %32 : vector<8x128xf32>
    %35 = math.exp %34 : vector<8x128xf32>
    %cst_20 = arith.constant 1.000000e+00 : f32
    %36 = vector.broadcast %cst_20 : f32 to vector<8x128xf32>
    %37 = arith.addf %36, %35 : vector<8x128xf32>
    %cst_21 = arith.constant 1.000000e+00 : f32
    %38 = vector.broadcast %cst_21 : f32 to vector<8x128xf32>
    %39 = arith.divf %38, %37 : vector<8x128xf32>
    %c0_22 = arith.constant 0 : index
    %c0_23 = arith.constant 0 : index
    %c0_24 = arith.constant 0 : index
    %40 = vector.load %arg5[%c0_22, %c0_23, %c0_24] : memref<4x8x128xf32, #tpu.memory_space<vmem>>, vector<1x8x128xf32>
    %41 = vector.shape_cast %40 : vector<1x8x128xf32> to vector<8x128xf32>
    %42 = vector.shape_cast %39 : vector<8x128xf32> to vector<1x8x128xf32>
    tpu.vector_store %arg5[%c0_22, %c0_23, %c0_24], %42 {strides = array<i32>} : memref<4x8x128xf32, #tpu.memory_space<vmem>>, vector<1x8x128xf32>,
    %43 = arith.truncf %39 : vector<8x128xf32> to vector<8x128xbf16>
    %cst_25 = arith.constant dense<0.000000e+00> : vector<8x128xf32>
    %44 = tpu.matmul %43, %3, %cst_25 {dimension_numbers = #tpu.dot_dimension_numbers<[1], [0], [0], [1], [0, 0, 1, 1], [], []>} : vector<8x128xbf16>, vector<128x128xbf16>, vector<8x128xf32> -> vector<8x128xf32>
    %cst_26 = arith.constant 0.899999976 : f32
    %45 = vector.broadcast %cst_26 : f32 to vector<8x128xf32>
    %46 = arith.mulf %45, %32 : vector<8x128xf32>
    %cst_27 = arith.constant 1.000000e-01 : f32
    %47 = vector.broadcast %cst_27 : f32 to vector<8x128xf32>
    %48 = arith.mulf %47, %44 : vector<8x128xf32>
    %49 = arith.addf %46, %48 : vector<8x128xf32>
    %c2 = arith.constant 2 : index
    %c0_28 = arith.constant 0 : index
    %c0_29 = arith.constant 0 : index
    %50 = vector.load %arg2[%c2, %c0_28, %c0_29] : memref<8x8x128xf32, #tpu.memory_space<vmem>>, vector<1x8x128xf32>
    %51 = vector.shape_cast %50 : vector<1x8x128xf32> to vector<8x128xf32>
    %52 = arith.addf %49, %51 : vector<8x128xf32>
    %cst_30 = arith.constant 0.000000e+00 : f32
    %53 = vector.broadcast %cst_30 : f32 to vector<8x128xf32>
    %54 = arith.subf %53, %52 : vector<8x128xf32>
    %55 = math.exp %54 : vector<8x128xf32>
    %cst_31 = arith.constant 1.000000e+00 : f32
    %56 = vector.broadcast %cst_31 : f32 to vector<8x128xf32>
    %57 = arith.addf %56, %55 : vector<8x128xf32>
    %cst_32 = arith.constant 1.000000e+00 : f32
    %58 = vector.broadcast %cst_32 : f32 to vector<8x128xf32>
    %59 = arith.divf %58, %57 : vector<8x128xf32>
    %60 = arith.truncf %59 : vector<8x128xf32> to vector<8x128xbf16>
    %cst_33 = arith.constant dense<0.000000e+00> : vector<8x128xf32>
    %61 = tpu.matmul %60, %3, %cst_33 {dimension_numbers = #tpu.dot_dimension_numbers<[1], [0], [0], [1], [0, 0, 1, 1], [], []>} : vector<8x128xbf16>, vector<128x128xbf16>, vector<8x128xf32> -> vector<8x128xf32>
    %cst_34 = arith.constant 0.899999976 : f32
    %62 = vector.broadcast %cst_34 : f32 to vector<8x128xf32>
    %63 = arith.mulf %62, %52 : vector<8x128xf32>
    %cst_35 = arith.constant 1.000000e-01 : f32
    %64 = vector.broadcast %cst_35 : f32 to vector<8x128xf32>
    %65 = arith.mulf %64, %61 : vector<8x128xf32>
    %66 = arith.addf %63, %65 : vector<8x128xf32>
    %c3 = arith.constant 3 : index
    %c0_36 = arith.constant 0 : index
    %c0_37 = arith.constant 0 : index
    %67 = vector.load %arg2[%c3, %c0_36, %c0_37] : memref<8x8x128xf32, #tpu.memory_space<vmem>>, vector<1x8x128xf32>
    %68 = vector.shape_cast %67 : vector<1x8x128xf32> to vector<8x128xf32>
    %69 = arith.addf %66, %68 : vector<8x128xf32>
    %cst_38 = arith.constant 0.000000e+00 : f32
    %70 = vector.broadcast %cst_38 : f32 to vector<8x128xf32>
    %71 = arith.subf %70, %69 : vector<8x128xf32>
    %72 = math.exp %71 : vector<8x128xf32>
    %cst_39 = arith.constant 1.000000e+00 : f32
    %73 = vector.broadcast %cst_39 : f32 to vector<8x128xf32>
    %74 = arith.addf %73, %72 : vector<8x128xf32>
    %cst_40 = arith.constant 1.000000e+00 : f32
    %75 = vector.broadcast %cst_40 : f32 to vector<8x128xf32>
    %76 = arith.divf %75, %74 : vector<8x128xf32>
    %c1_41 = arith.constant 1 : index
    %c0_42 = arith.constant 0 : index
    %c0_43 = arith.constant 0 : index
    %77 = vector.load %arg5[%c1_41, %c0_42, %c0_43] : memref<4x8x128xf32, #tpu.memory_space<vmem>>, vector<1x8x128xf32>
    %78 = vector.shape_cast %77 : vector<1x8x128xf32> to vector<8x128xf32>
    %79 = vector.shape_cast %76 : vector<8x128xf32> to vector<1x8x128xf32>
    tpu.vector_store %arg5[%c1_41, %c0_42, %c0_43], %79 {strides = array<i32>} : memref<4x8x128xf32, #tpu.memory_space<vmem>>, vector<1x8x128xf32>,
    %80 = arith.truncf %76 : vector<8x128xf32> to vector<8x128xbf16>
    %cst_44 = arith.constant dense<0.000000e+00> : vector<8x128xf32>
    %81 = tpu.matmul %80, %3, %cst_44 {dimension_numbers = #tpu.dot_dimension_numbers<[1], [0], [0], [1], [0, 0, 1, 1], [], []>} : vector<8x128xbf16>, vector<128x128xbf16>, vector<8x128xf32> -> vector<8x128xf32>
    %cst_45 = arith.constant 0.899999976 : f32
    %82 = vector.broadcast %cst_45 : f32 to vector<8x128xf32>
    %83 = arith.mulf %82, %69 : vector<8x128xf32>
    %cst_46 = arith.constant 1.000000e-01 : f32
    %84 = vector.broadcast %cst_46 : f32 to vector<8x128xf32>
    %85 = arith.mulf %84, %81 : vector<8x128xf32>
    %86 = arith.addf %83, %85 : vector<8x128xf32>
    %c4 = arith.constant 4 : index
    %c0_47 = arith.constant 0 : index
    %c0_48 = arith.constant 0 : index
    %87 = vector.load %arg2[%c4, %c0_47, %c0_48] : memref<8x8x128xf32, #tpu.memory_space<vmem>>, vector<1x8x128xf32>
    %88 = vector.shape_cast %87 : vector<1x8x128xf32> to vector<8x128xf32>
    %89 = arith.addf %86, %88 : vector<8x128xf32>
    %cst_49 = arith.constant 0.000000e+00 : f32
    %90 = vector.broadcast %cst_49 : f32 to vector<8x128xf32>
    %91 = arith.subf %90, %89 : vector<8x128xf32>
    %92 = math.exp %91 : vector<8x128xf32>
    %cst_50 = arith.constant 1.000000e+00 : f32
    %93 = vector.broadcast %cst_50 : f32 to vector<8x128xf32>
    %94 = arith.addf %93, %92 : vector<8x128xf32>
    %cst_51 = arith.constant 1.000000e+00 : f32
    %95 = vector.broadcast %cst_51 : f32 to vector<8x128xf32>
    %96 = arith.divf %95, %94 : vector<8x128xf32>
    %97 = arith.truncf %96 : vector<8x128xf32> to vector<8x128xbf16>
    %cst_52 = arith.constant dense<0.000000e+00> : vector<8x128xf32>
    %98 = tpu.matmul %97, %3, %cst_52 {dimension_numbers = #tpu.dot_dimension_numbers<[1], [0], [0], [1], [0, 0, 1, 1], [], []>} : vector<8x128xbf16>, vector<128x128xbf16>, vector<8x128xf32> -> vector<8x128xf32>
    %cst_53 = arith.constant 0.899999976 : f32
    %99 = vector.broadcast %cst_53 : f32 to vector<8x128xf32>
    %100 = arith.mulf %99, %89 : vector<8x128xf32>
    %cst_54 = arith.constant 1.000000e-01 : f32
    %101 = vector.broadcast %cst_54 : f32 to vector<8x128xf32>
    %102 = arith.mulf %101, %98 : vector<8x128xf32>
    %103 = arith.addf %100, %102 : vector<8x128xf32>
    %c5 = arith.constant 5 : index
    %c0_55 = arith.constant 0 : index
    %c0_56 = arith.constant 0 : index
    %104 = vector.load %arg2[%c5, %c0_55, %c0_56] : memref<8x8x128xf32, #tpu.memory_space<vmem>>, vector<1x8x128xf32>
    %105 = vector.shape_cast %104 : vector<1x8x128xf32> to vector<8x128xf32>
    %106 = arith.addf %103, %105 : vector<8x128xf32>
    %cst_57 = arith.constant 0.000000e+00 : f32
    %107 = vector.broadcast %cst_57 : f32 to vector<8x128xf32>
    %108 = arith.subf %107, %106 : vector<8x128xf32>
    %109 = math.exp %108 : vector<8x128xf32>
    %cst_58 = arith.constant 1.000000e+00 : f32
    %110 = vector.broadcast %cst_58 : f32 to vector<8x128xf32>
    %111 = arith.addf %110, %109 : vector<8x128xf32>
    %cst_59 = arith.constant 1.000000e+00 : f32
    %112 = vector.broadcast %cst_59 : f32 to vector<8x128xf32>
    %113 = arith.divf %112, %111 : vector<8x128xf32>
    %c2_60 = arith.constant 2 : index
    %c0_61 = arith.constant 0 : index
    %c0_62 = arith.constant 0 : index
    %114 = vector.load %arg5[%c2_60, %c0_61, %c0_62] : memref<4x8x128xf32, #tpu.memory_space<vmem>>, vector<1x8x128xf32>
    %115 = vector.shape_cast %114 : vector<1x8x128xf32> to vector<8x128xf32>
    %116 = vector.shape_cast %113 : vector<8x128xf32> to vector<1x8x128xf32>
    tpu.vector_store %arg5[%c2_60, %c0_61, %c0_62], %116 {strides = array<i32>} : memref<4x8x128xf32, #tpu.memory_space<vmem>>, vector<1x8x128xf32>,
    %117 = arith.truncf %113 : vector<8x128xf32> to vector<8x128xbf16>
    %cst_63 = arith.constant dense<0.000000e+00> : vector<8x128xf32>
    %118 = tpu.matmul %117, %3, %cst_63 {dimension_numbers = #tpu.dot_dimension_numbers<[1], [0], [0], [1], [0, 0, 1, 1], [], []>} : vector<8x128xbf16>, vector<128x128xbf16>, vector<8x128xf32> -> vector<8x128xf32>
    %cst_64 = arith.constant 0.899999976 : f32
    %119 = vector.broadcast %cst_64 : f32 to vector<8x128xf32>
    %120 = arith.mulf %119, %106 : vector<8x128xf32>
    %cst_65 = arith.constant 1.000000e-01 : f32
    %121 = vector.broadcast %cst_65 : f32 to vector<8x128xf32>
    %122 = arith.mulf %121, %118 : vector<8x128xf32>
    %123 = arith.addf %120, %122 : vector<8x128xf32>
    %c6 = arith.constant 6 : index
    %c0_66 = arith.constant 0 : index
    %c0_67 = arith.constant 0 : index
    %124 = vector.load %arg2[%c6, %c0_66, %c0_67] : memref<8x8x128xf32, #tpu.memory_space<vmem>>, vector<1x8x128xf32>
    %125 = vector.shape_cast %124 : vector<1x8x128xf32> to vector<8x128xf32>
    %126 = arith.addf %123, %125 : vector<8x128xf32>
    %cst_68 = arith.constant 0.000000e+00 : f32
    %127 = vector.broadcast %cst_68 : f32 to vector<8x128xf32>
    %128 = arith.subf %127, %126 : vector<8x128xf32>
    %129 = math.exp %128 : vector<8x128xf32>
    %cst_69 = arith.constant 1.000000e+00 : f32
    %130 = vector.broadcast %cst_69 : f32 to vector<8x128xf32>
    %131 = arith.addf %130, %129 : vector<8x128xf32>
    %cst_70 = arith.constant 1.000000e+00 : f32
    %132 = vector.broadcast %cst_70 : f32 to vector<8x128xf32>
    %133 = arith.divf %132, %131 : vector<8x128xf32>
    %134 = arith.truncf %133 : vector<8x128xf32> to vector<8x128xbf16>
    %cst_71 = arith.constant dense<0.000000e+00> : vector<8x128xf32>
    %135 = tpu.matmul %134, %3, %cst_71 {dimension_numbers = #tpu.dot_dimension_numbers<[1], [0], [0], [1], [0, 0, 1, 1], [], []>} : vector<8x128xbf16>, vector<128x128xbf16>, vector<8x128xf32> -> vector<8x128xf32>
    %cst_72 = arith.constant 0.899999976 : f32
    %136 = vector.broadcast %cst_72 : f32 to vector<8x128xf32>
    %137 = arith.mulf %136, %126 : vector<8x128xf32>
    %cst_73 = arith.constant 1.000000e-01 : f32
    %138 = vector.broadcast %cst_73 : f32 to vector<8x128xf32>
    %139 = arith.mulf %138, %135 : vector<8x128xf32>
    %140 = arith.addf %137, %139 : vector<8x128xf32>
    %c7 = arith.constant 7 : index
    %c0_74 = arith.constant 0 : index
    %c0_75 = arith.constant 0 : index
    %141 = vector.load %arg2[%c7, %c0_74, %c0_75] : memref<8x8x128xf32, #tpu.memory_space<vmem>>, vector<1x8x128xf32>
    %142 = vector.shape_cast %141 : vector<1x8x128xf32> to vector<8x128xf32>
    %143 = arith.addf %140, %142 : vector<8x128xf32>
    %cst_76 = arith.constant 0.000000e+00 : f32
    %144 = vector.broadcast %cst_76 : f32 to vector<8x128xf32>
    %145 = arith.subf %144, %143 : vector<8x128xf32>
    %146 = math.exp %145 : vector<8x128xf32>
    %cst_77 = arith.constant 1.000000e+00 : f32
    %147 = vector.broadcast %cst_77 : f32 to vector<8x128xf32>
    %148 = arith.addf %147, %146 : vector<8x128xf32>
    %cst_78 = arith.constant 1.000000e+00 : f32
    %149 = vector.broadcast %cst_78 : f32 to vector<8x128xf32>
    %150 = arith.divf %149, %148 : vector<8x128xf32>
    %c3_79 = arith.constant 3 : index
    %c0_80 = arith.constant 0 : index
    %c0_81 = arith.constant 0 : index
    %151 = vector.load %arg5[%c3_79, %c0_80, %c0_81] : memref<4x8x128xf32, #tpu.memory_space<vmem>>, vector<1x8x128xf32>
    %152 = vector.shape_cast %151 : vector<1x8x128xf32> to vector<8x128xf32>
    %153 = vector.shape_cast %150 : vector<8x128xf32> to vector<1x8x128xf32>
    tpu.vector_store %arg5[%c3_79, %c0_80, %c0_81], %153 {strides = array<i32>} : memref<4x8x128xf32, #tpu.memory_space<vmem>>, vector<1x8x128xf32>,
    %c0_82 = arith.constant 0 : index
    %c0_83 = arith.constant 0 : index
    %154 = vector.load %arg6[%c0_82, %c0_83] : memref<8x128xf32, #tpu.memory_space<vmem>>, vector<8x128xf32>
    tpu.vector_store %arg6[%c0_82, %c0_83], %143 {strides = array<i32>} : memref<8x128xf32, #tpu.memory_space<vmem>>, vector<8x128xf32>,
    %c0_84 = arith.constant 0 : index
    %c0_85 = arith.constant 0 : index
    %155 = vector.load %arg7[%c0_84, %c0_85] : memref<8x128xf32, #tpu.memory_space<vmem>>, vector<8x128xf32>
    tpu.vector_store %arg7[%c0_84, %c0_85], %150 {strides = array<i32>} : memref<8x128xf32, #tpu.memory_space<vmem>>, vector<8x128xf32>,
    return
  }
  func.func @transform_0(%arg0: i32, %arg1: i32) -> (i32, i32, i32) {
    %c0_i32 = arith.constant 0 : i32
    %c0_i32_0 = arith.constant 0 : i32
    return %arg1, %arg0, %c0_i32 : i32, i32, i32
  }
  func.func @transform_1(%arg0: i32, %arg1: i32) -> (i32, i32) {
    %c0_i32 = arith.constant 0 : i32
    %c0_i32_0 = arith.constant 0 : i32
    %c0_i32_1 = arith.constant 0 : i32
    return %c0_i32, %c0_i32_0 : i32, i32
  }
  func.func @transform_2(%arg0: i32, %arg1: i32) -> (i32, i32) {
    %c0_i32 = arith.constant 0 : i32
    %c0_i32_0 = arith.constant 0 : i32
    return %arg0, %c0_i32 : i32, i32
  }
  func.func @transform_3(%arg0: i32, %arg1: i32) -> (i32, i32, i32) {
    %c0_i32 = arith.constant 0 : i32
    %c0_i32_0 = arith.constant 0 : i32
    return %arg1, %arg0, %c0_i32 : i32, i32, i32
  }
}

</mosaic_0001>

<llo_original>
// kernel: tpu_custom_call.1
$region0: #{tpu_custom_call.1}
  #allocation0 [shape = 'u32[]', space=smem, size = 0x4, offset = 0x4, fixed_abs, tag = 'smem constant byte address 0x4 - core index']
  #allocation1 [shape = 'u32[72,128]{1,0:T(1,128)}', space=vmem, size = 0x9000, scoped, tag = 'internal scratch']
  #allocation2 [shape = 'f32[8,128]{1,0:T(8,128)}', space=vmem, size = 0x1000, scoped, tag = 'scratch operand']
  #allocation3 [shape = 'f32[8,128]{1,0:T(8,128)}', space=vmem, size = 0x1000, scoped, tag = 'scratch operand']
  %s0 = inlined_call_operand.hbm [shape: f32[8,8,128], index: 0, kind: input, shape index: {}]
  %s1 = inlined_call_operand.hbm [shape: bf16[128,128], index: 1, kind: input, shape index: {}]
  %s2 = inlined_call_operand.hbm [shape: f32[8,128], index: 2, kind: input, shape index: {}]
  %s3 = inlined_call_operand.hbm [shape: f32[4,8,128], index: 3, kind: output, shape index: {}]
  %s4 = sld [smem:[#allocation0]]
  $region38: #{tpu_custom_call.1} parent=0
    _
  %s6 = ssub.s32 1, %s4
  %s7 = scalar_select 0, %s6, %s4
  $region1: #{tpu_custom_call.1} parent=0
    #allocation4 [shape = 'u8[32768]{0}', space=vmem, size = 0x8000, scoped, tag = 'input window, operand 0, single buffered']
    #allocation5 [shape = 's32[1]{0}', space=sflag, size = 0x4, scoped, tag = 'scoped memory for tpu_custom_call.1']
    #allocation6 [shape = 's32[1]{0}', space=sflag, size = 0x4, scoped, tag = 'scoped memory for tpu_custom_call.1']
    #allocation7 [shape = 'u8[32768]{0}', space=vmem, size = 0x8000, scoped, tag = 'input window, operand 1, single buffered']
    #allocation8 [shape = 's32[1]{0}', space=sflag, size = 0x4, scoped, tag = 'scoped memory for tpu_custom_call.1']
    #allocation9 [shape = 'u8[4096]{0}', space=vmem, size = 0x1000, scoped, tag = 'input window, operand 2, single buffered']
    #allocation10 [shape = 'u8[16384]{0}', space=vmem, size = 0x4000, scoped, tag = 'output window, operand 0, single buffered']
    %8 = vsyncpa [#allocation5], 0
    %9 = vsyncpa [#allocation8], 0
    %10 = vsyncpa [#allocation6], 0
    // Predicated region
    $region2: #{tpu_custom_call.1} parent=1 // pred_check
      _
    $region3: #{tpu_custom_call.1} parent=1 // pred_check_branch
      %12 = sbr.rel (0) target = $region5
    $region4: #{tpu_custom_call.1} parent=1 // pred_region
      %14 = vsyncadd [#allocation5], 0
      %s15 = sshll.u32 %s0, 4
      %s16 = int_to_ptr.hbm [resolvable:$true] %s15
      %s17 = sshll.u32 [#allocation4], 4
      %s18 = int_to_ptr.vmem [resolvable:$true] %s17
      %23 = dma.hbm_to_vmem [thread:$0]  %s16, 1024, %s18, [#allocation5], 128, 128, 8
    $region5: #{tpu_custom_call.1} parent=1 // pred_fallthru
      _
    // Predicated region
    $region6: #{tpu_custom_call.1} parent=1 // pred_check
      _
    $region7: #{tpu_custom_call.1} parent=1 // pred_check_branch
      %25 = sbr.rel (0) target = $region9
    $region8: #{tpu_custom_call.1} parent=1 // pred_region
      %27 = vsyncadd [#allocation8], 0
      %s28 = sshll.u32 %s1, 4
      %s29 = int_to_ptr.hbm [resolvable:$true] %s28
      %s30 = sshll.u32 [#allocation7], 4
      %s31 = int_to_ptr.vmem [resolvable:$true] %s30
      %36 = dma.hbm_to_vmem [thread:$0]  %s29, 1024, %s31, [#allocation8], 64, 64, 4
    $region9: #{tpu_custom_call.1} parent=1 // pred_fallthru
      _
    // Predicated region
    $region10: #{tpu_custom_call.1} parent=1 // pred_check
      _
    $region11: #{tpu_custom_call.1} parent=1 // pred_check_branch
      %38 = sbr.rel (0) target = $region13
    $region12: #{tpu_custom_call.1} parent=1 // pred_region
      %40 = vsyncadd [#allocation8], 0
      %s42 = sshll.u32 %s2, 4
      %s43 = int_to_ptr.hbm [resolvable:$true] %s42
      %s44 = sshll.u32 [#allocation9], 4
      %s45 = int_to_ptr.vmem [resolvable:$true] %s44
      %47 = dma.hbm_to_vmem [thread:$0]  %s43, 128, %s45, [#allocation8]
    $region13: #{tpu_custom_call.1} parent=1 // pred_fallthru
      _
    // Predicated region
    $region14: #{tpu_custom_call.1} parent=1 // pred_check
      _
    $region15: #{tpu_custom_call.1} parent=1 // pred_check_branch
      %49 = sbr.rel (0) target = $region17
    $region16: #{tpu_custom_call.1} parent=1 // pred_region
      %51 = dma.done [#allocation5], 1024
    $region17: #{tpu_custom_call.1} parent=1 // pred_fallthru
      _
    // Predicated region
    $region18: #{tpu_custom_call.1} parent=1 // pred_check
      _
    $region19: #{tpu_custom_call.1} parent=1 // pred_check_branch
      %53 = sbr.rel (0) target = $region21
    $region20: #{tpu_custom_call.1} parent=1 // pred_region
      %55 = dma.done [#allocation8], 1024
    $region21: #{tpu_custom_call.1} parent=1 // pred_fallthru
      _
    // Predicated region
    $region22: #{tpu_custom_call.1} parent=1 // pred_check
      _
    $region23: #{tpu_custom_call.1} parent=1 // pred_check_branch
      %57 = sbr.rel (0) target = $region25
    $region24: #{tpu_custom_call.1} parent=1 // pred_region
      %59 = dma.done [#allocation8], 128
    $region25: #{tpu_custom_call.1} parent=1 // pred_fallthru
      _
    %p60 = scmp.eq.s32.totalorder 0, 0
    // Predicated region
    $region26: #{tpu_custom_call.1} parent=1 // pred_check
      %p61 = pneg %p60
    $region27: #{tpu_custom_call.1} parent=1 // pred_check_branch
      %63 = sbr.rel (%p61) target = $region29
    $region28: #{tpu_custom_call.1} parent=1 // pred_region
      %v64 = vld [vmem:[#allocation9] sm:$0xff]
      %65 = vst [vmem:[#allocation2] sm:$0xff] %v64
      %v66 = vsub.f32 0.0, %v64
      %v67 = vmul.f32 %v66, 1.442695
      %v68 = vpow.pop %v67
      %v69 = vadd.f32 %v68, 1.0
      %v70 = vrcp.pop %v69
      %v71 = vmul.f32 %v69, %v70
      %v72 = vsub.f32 1.0, %v71
      %v73 = vmul.f32 %v70, %v72
      %v74 = vadd.f32 %v70, %v73
      %vm75 = vweird.f32 %v69
      %vm76 = vweird.f32 %v70
      %vm77 = vmor %vm75, %vm76
      %v78 = vsel %vm77, %v70, %v74
      %v79 = vand.u32 2147483647, %v69
      %vm80 = vcmp.eq.f32.partialorder %v79, 8.507059e+37
      %v81 = vand.u32 %v69, 2147483648
      %v82 = vor.u32 1.1754944e-38, %v81
      %v83 = vsel %vm80, %v82, %v78
      %v84 = vmul.f32 1.0, %v83
      %85 = vst [vmem:[#allocation3] sm:$0xff] %v84
    $region29: #{tpu_custom_call.1} parent=1 // pred_fallthru
      _
    %v86 = vld [vmem:[#allocation7] sm:$0xf]
    %v87 = vld [vmem:[#allocation7 + $0x4] sm:$0xf]
    %v88 = vld [vmem:[#allocation7 + $0x8] sm:$0xf]
    %v89 = vld [vmem:[#allocation7 + $0xc] sm:$0xf]
    %v90 = vld [vmem:[#allocation7 + $0x10] sm:$0xf]
    %v91 = vld [vmem:[#allocation7 + $0x14] sm:$0xf]
    %v92 = vld [vmem:[#allocation7 + $0x18] sm:$0xf]
    %v93 = vld [vmem:[#allocation7 + $0x1c] sm:$0xf]
    %v94 = vld [vmem:[#allocation7 + $0x20] sm:$0xf]
    %v95 = vld [vmem:[#allocation7 + $0x24] sm:$0xf]
    %v96 = vld [vmem:[#allocation7 + $0x28] sm:$0xf]
    %v97 = vld [vmem:[#allocation7 + $0x2c] sm:$0xf]
    %v98 = vld [vmem:[#allocation7 + $0x30] sm:$0xf]
    %v99 = vld [vmem:[#allocation7 + $0x34] sm:$0xf]
    %v100 = vld [vmem:[#allocation7 + $0x38] sm:$0xf]
    %v101 = vld [vmem:[#allocation7 + $0x3c] sm:$0xf]
    %v102 = vld [vmem:[#allocation2] sm:$0xff]
    %v103 = vld [vmem:[#allocation3] sm:$0xff]
    %v104 = vpack.c.bf16 %v103, %v103
    %v121 = vunpack.c.l.b16 %v86
    %v122 = vunpack.c.l.b16 %v87
    %v123 = vunpack.c.l.b16 %v88
    %v124 = vunpack.c.l.b16 %v89
    %v125 = vunpack.c.l.b16 %v90
    %v126 = vunpack.c.l.b16 %v91
    %v127 = vunpack.c.l.b16 %v92
    %v128 = vunpack.c.l.b16 %v93
    %v129 = vunpack.c.l.b16 %v94
    %v130 = vunpack.c.l.b16 %v95
    %v131 = vunpack.c.l.b16 %v96
    %v132 = vunpack.c.l.b16 %v97
    %v133 = vunpack.c.l.b16 %v98
    %v134 = vunpack.c.l.b16 %v99
    %v135 = vunpack.c.l.b16 %v100
    %v136 = vunpack.c.l.b16 %v101
    %v137 = vpack.c.b16 %v122, %v121
    %v138 = vpack.c.b16 %v124, %v123
    %v139 = vpack.c.b16 %v126, %v125
    %v140 = vpack.c.b16 %v128, %v127
    %v141 = vpack.c.b16 %v130, %v129
    %v142 = vpack.c.b16 %v132, %v131
    %v143 = vpack.c.b16 %v134, %v133
    %v144 = vpack.c.b16 %v136, %v135
    %153 = vmatpush.bf16.msra.mxu0 %v144
    %154 = vmatpush.bf16.msra.mxu0 %v143
    %155 = vmatpush.bf16.msra.mxu0 %v142
    %156 = vmatpush.bf16.msra.mxu0 %v141
    %157 = vmatpush.bf16.msra.mxu0 %v140
    %158 = vmatpush.bf16.msra.mxu0 %v139
    %159 = vmatpush.bf16.msra.mxu0 %v138
    %160 = vmatpush.bf16.msra.mxu0 %v137
    %161 = vmatmul.bf16.gmra.mxu0 %v104
    %v162 = vpop.f32.mrf.mxu0
    %v163 = vadd.f32 0.0, %v162
    %v164 = vpop.f32.mrf.mxu0
    %165 = vdwg.mxu0
    %v166 = vmul.f32 %v102, 0.9
    %v167 = vmul.f32 %v163, 0.1
    %v168 = vadd.f32 %v166, %v167
    %v169 = vld [vmem:[#allocation4] sm:$0xff]
    %v170 = vadd.f32 %v168, %v169
    %v171 = vsub.f32 0.0, %v170
    %v172 = vmul.f32 %v171, 1.442695
    %v173 = vpow.pop %v172
    %v174 = vadd.f32 %v173, 1.0
    %v175 = vrcp.pop %v174
    %v176 = vmul.f32 %v174, %v175
    %v177 = vsub.f32 1.0, %v176
    %v178 = vmul.f32 %v175, %v177
    %v179 = vadd.f32 %v175, %v178
    %vm180 = vweird.f32 %v174
    %vm181 = vweird.f32 %v175
    %vm182 = vmor %vm180, %vm181
    %v183 = vsel %vm182, %v175, %v179
    %v184 = vand.u32 2147483647, %v174
    %vm185 = vcmp.eq.f32.partialorder %v184, 8.507059e+37
    %v186 = vand.u32 %v174, 2147483648
    %v187 = vor.u32 1.1754944e-38, %v186
    %v188 = vsel %vm185, %v187, %v183
    %v189 = vmul.f32 1.0, %v188
    %v190 = vpack.c.bf16 %v189, %v189
    %191 = vmatpush.bf16.msra.mxu0 %v144
    %192 = vmatpush.bf16.msra.mxu0 %v143
    %193 = vmatpush.bf16.msra.mxu0 %v142
    %194 = vmatpush.bf16.msra.mxu0 %v141
    %195 = vmatpush.bf16.msra.mxu0 %v140
    %196 = vmatpush.bf16.msra.mxu0 %v139
    %197 = vmatpush.bf16.msra.mxu0 %v138
    %198 = vmatpush.bf16.msra.mxu0 %v137
    %199 = vmatmul.bf16.gmra.mxu0 %v190
    %v200 = vpop.f32.mrf.mxu0
    %v201 = vadd.f32 0.0, %v200
    %v202 = vpop.f32.mrf.mxu0
    %203 = vdwg.mxu0
    %v204 = vmul.f32 %v170, 0.9
    %v205 = vmul.f32 %v201, 0.1
    %v206 = vadd.f32 %v204, %v205
    %s207 = scalar_lea.vmem [#allocation4], 8
    %v208 = vld [vmem:[%s207] sm:$0xff]
    %v209 = vadd.f32 %v206, %v208
    %v210 = vsub.f32 0.0, %v209
    %v211 = vmul.f32 %v210, 1.442695
    %v212 = vpow.pop %v211
    %v213 = vadd.f32 %v212, 1.0
    %v214 = vrcp.pop %v213
    %v215 = vmul.f32 %v213, %v214
    %v216 = vsub.f32 1.0, %v215
    %v217 = vmul.f32 %v214, %v216
    %v218 = vadd.f32 %v214, %v217
    %vm219 = vweird.f32 %v213
    %vm220 = vweird.f32 %v214
    %vm221 = vmor %vm219, %vm220
    %v222 = vsel %vm221, %v214, %v218
    %v223 = vand.u32 2147483647, %v213
    %vm224 = vcmp.eq.f32.partialorder %v223, 8.507059e+37
    %v225 = vand.u32 %v213, 2147483648
    %v226 = vor.u32 1.1754944e-38, %v225
    %v227 = vsel %vm224, %v226, %v222
    %v228 = vmul.f32 1.0, %v227
    %229 = vst [vmem:[#allocation10] sm:$0xff] %v228
    %v230 = vpack.c.bf16 %v228, %v228
    %231 = vmatpush.bf16.msra.mxu0 %v144
    %232 = vmatpush.bf16.msra.mxu0 %v143
    %233 = vmatpush.bf16.msra.mxu0 %v142
    %234 = vmatpush.bf16.msra.mxu0 %v141
    %235 = vmatpush.bf16.msra.mxu0 %v140
    %236 = vmatpush.bf16.msra.mxu0 %v139
    %237 = vmatpush.bf16.msra.mxu0 %v138
    %238 = vmatpush.bf16.msra.mxu0 %v137
    %239 = vmatmul.bf16.gmra.mxu0 %v230
    %v240 = vpop.f32.mrf.mxu0
    %v241 = vadd.f32 0.0, %v240
    %v242 = vpop.f32.mrf.mxu0
    %243 = vdwg.mxu0
    %v244 = vmul.f32 %v209, 0.9
    %v245 = vmul.f32 %v241, 0.1
    %v246 = vadd.f32 %v244, %v245
    %s247 = scalar_lea.vmem [#allocation4], 16
    %v248 = vld [vmem:[%s247] sm:$0xff]
    %v249 = vadd.f32 %v246, %v248
    %v250 = vsub.f32 0.0, %v249
    %v251 = vmul.f32 %v250, 1.442695
    %v252 = vpow.pop %v251
    %v253 = vadd.f32 %v252, 1.0
    %v254 = vrcp.pop %v253
    %v255 = vmul.f32 %v253, %v254
    %v256 = vsub.f32 1.0, %v255
    %v257 = vmul.f32 %v254, %v256
    %v258 = vadd.f32 %v254, %v257
    %vm259 = vweird.f32 %v253
    %vm260 = vweird.f32 %v254
    %vm261 = vmor %vm259, %vm260
    %v262 = vsel %vm261, %v254, %v258
    %v263 = vand.u32 2147483647, %v253
    %vm264 = vcmp.eq.f32.partialorder %v263, 8.507059e+37
    %v265 = vand.u32 %v253, 2147483648
    %v266 = vor.u32 1.1754944e-38, %v265
    %v267 = vsel %vm264, %v266, %v262
    %v268 = vmul.f32 1.0, %v267
    %v269 = vpack.c.bf16 %v268, %v268
    %270 = vmatpush.bf16.msra.mxu0 %v144
    %271 = vmatpush.bf16.msra.mxu0 %v143
    %272 = vmatpush.bf16.msra.mxu0 %v142
    %273 = vmatpush.bf16.msra.mxu0 %v141
    %274 = vmatpush.bf16.msra.mxu0 %v140
    %275 = vmatpush.bf16.msra.mxu0 %v139
    %276 = vmatpush.bf16.msra.mxu0 %v138
    %277 = vmatpush.bf16.msra.mxu0 %v137
    %278 = vmatmul.bf16.gmra.mxu0 %v269
    %v279 = vpop.f32.mrf.mxu0
    %v280 = vadd.f32 0.0, %v279
    %v281 = vpop.f32.mrf.mxu0
    %282 = vdwg.mxu0
    %v283 = vmul.f32 %v249, 0.9
    %v284 = vmul.f32 %v280, 0.1
    %v285 = vadd.f32 %v283, %v284
    %s286 = scalar_lea.vmem [#allocation4], 24
    %v287 = vld [vmem:[%s286] sm:$0xff]
    %v288 = vadd.f32 %v285, %v287
    %v289 = vsub.f32 0.0, %v288
    %v290 = vmul.f32 %v289, 1.442695
    %v291 = vpow.pop %v290
    %v292 = vadd.f32 %v291, 1.0
    %v293 = vrcp.pop %v292
    %v294 = vmul.f32 %v292, %v293
    %v295 = vsub.f32 1.0, %v294
    %v296 = vmul.f32 %v293, %v295
    %v297 = vadd.f32 %v293, %v296
    %vm298 = vweird.f32 %v292
    %vm299 = vweird.f32 %v293
    %vm300 = vmor %vm298, %vm299
    %v301 = vsel %vm300, %v293, %v297
    %v302 = vand.u32 2147483647, %v292
    %vm303 = vcmp.eq.f32.partialorder %v302, 8.507059e+37
    %v304 = vand.u32 %v292, 2147483648
    %v305 = vor.u32 1.1754944e-38, %v304
    %v306 = vsel %vm303, %v305, %v301
    %v307 = vmul.f32 1.0, %v306
    %s308 = scalar_lea.vmem [#allocation10], 8
    %309 = vst [vmem:[%s308] sm:$0xff] %v307
    %v310 = vpack.c.bf16 %v307, %v307
    %311 = vmatpush.bf16.msra.mxu0 %v144
    %312 = vmatpush.bf16.msra.mxu0 %v143
    %313 = vmatpush.bf16.msra.mxu0 %v142
    %314 = vmatpush.bf16.msra.mxu0 %v141
    %315 = vmatpush.bf16.msra.mxu0 %v140
    %316 = vmatpush.bf16.msra.mxu0 %v139
    %317 = vmatpush.bf16.msra.mxu0 %v138
    %318 = vmatpush.bf16.msra.mxu0 %v137
    %319 = vmatmul.bf16.gmra.mxu0 %v310
    %v320 = vpop.f32.mrf.mxu0
    %v321 = vadd.f32 0.0, %v320
    %v322 = vpop.f32.mrf.mxu0
    %323 = vdwg.mxu0
    %v324 = vmul.f32 %v288, 0.9
    %v325 = vmul.f32 %v321, 0.1
    %v326 = vadd.f32 %v324, %v325
    %s327 = scalar_lea.vmem [#allocation4], 32
    %v328 = vld [vmem:[%s327] sm:$0xff]
    %v329 = vadd.f32 %v326, %v328
    %v330 = vsub.f32 0.0, %v329
    %v331 = vmul.f32 %v330, 1.442695
    %v332 = vpow.pop %v331
    %v333 = vadd.f32 %v332, 1.0
    %v334 = vrcp.pop %v333
    %v335 = vmul.f32 %v333, %v334
    %v336 = vsub.f32 1.0, %v335
    %v337 = vmul.f32 %v334, %v336
    %v338 = vadd.f32 %v334, %v337
    %vm339 = vweird.f32 %v333
    %vm340 = vweird.f32 %v334
    %vm341 = vmor %vm339, %vm340
    %v342 = vsel %vm341, %v334, %v338
    %v343 = vand.u32 2147483647, %v333
    %vm344 = vcmp.eq.f32.partialorder %v343, 8.507059e+37
    %v345 = vand.u32 %v333, 2147483648
    %v346 = vor.u32 1.1754944e-38, %v345
    %v347 = vsel %vm344, %v346, %v342
    %v348 = vmul.f32 1.0, %v347
    %v349 = vpack.c.bf16 %v348, %v348
    %350 = vmatpush.bf16.msra.mxu0 %v144
    %351 = vmatpush.bf16.msra.mxu0 %v143
    %352 = vmatpush.bf16.msra.mxu0 %v142
    %353 = vmatpush.bf16.msra.mxu0 %v141
    %354 = vmatpush.bf16.msra.mxu0 %v140
    %355 = vmatpush.bf16.msra.mxu0 %v139
    %356 = vmatpush.bf16.msra.mxu0 %v138
    %357 = vmatpush.bf16.msra.mxu0 %v137
    %358 = vmatmul.bf16.gmra.mxu0 %v349
    %v359 = vpop.f32.mrf.mxu0
    %v360 = vadd.f32 0.0, %v359
    %v361 = vpop.f32.mrf.mxu0
    %362 = vdwg.mxu0
    %v363 = vmul.f32 %v329, 0.9
    %v364 = vmul.f32 %v360, 0.1
    %v365 = vadd.f32 %v363, %v364
    %s366 = scalar_lea.vmem [#allocation4], 40
    %v367 = vld [vmem:[%s366] sm:$0xff]
    %v368 = vadd.f32 %v365, %v367
    %v369 = vsub.f32 0.0, %v368
    %v370 = vmul.f32 %v369, 1.442695
    %v371 = vpow.pop %v370
    %v372 = vadd.f32 %v371, 1.0
    %v373 = vrcp.pop %v372
    %v374 = vmul.f32 %v372, %v373
    %v375 = vsub.f32 1.0, %v374
    %v376 = vmul.f32 %v373, %v375
    %v377 = vadd.f32 %v373, %v376
    %vm378 = vweird.f32 %v372
    %vm379 = vweird.f32 %v373
    %vm380 = vmor %vm378, %vm379
    %v381 = vsel %vm380, %v373, %v377
    %v382 = vand.u32 2147483647, %v372
    %vm383 = vcmp.eq.f32.partialorder %v382, 8.507059e+37
    %v384 = vand.u32 %v372, 2147483648
    %v385 = vor.u32 1.1754944e-38, %v384
    %v386 = vsel %vm383, %v385, %v381
    %v387 = vmul.f32 1.0, %v386
    %s388 = scalar_lea.vmem [#allocation10], 16
    %389 = vst [vmem:[%s388] sm:$0xff] %v387
    %v390 = vpack.c.bf16 %v387, %v387
    %391 = vmatpush.bf16.msra.mxu0 %v144
    %392 = vmatpush.bf16.msra.mxu0 %v143
    %393 = vmatpush.bf16.msra.mxu0 %v142
    %394 = vmatpush.bf16.msra.mxu0 %v141
    %395 = vmatpush.bf16.msra.mxu0 %v140
    %396 = vmatpush.bf16.msra.mxu0 %v139
    %397 = vmatpush.bf16.msra.mxu0 %v138
    %398 = vmatpush.bf16.msra.mxu0 %v137
    %399 = vmatmul.bf16.gmra.mxu0 %v390
    %v400 = vpop.f32.mrf.mxu0
    %v401 = vadd.f32 0.0, %v400
    %v402 = vpop.f32.mrf.mxu0
    %403 = vdwg.mxu0
    %v404 = vmul.f32 %v368, 0.9
    %v405 = vmul.f32 %v401, 0.1
    %v406 = vadd.f32 %v404, %v405
    %s407 = scalar_lea.vmem [#allocation4], 48
    %v408 = vld [vmem:[%s407] sm:$0xff]
    %v409 = vadd.f32 %v406, %v408
    %v410 = vsub.f32 0.0, %v409
    %v411 = vmul.f32 %v410, 1.442695
    %v412 = vpow.pop %v411
    %v413 = vadd.f32 %v412, 1.0
    %v414 = vrcp.pop %v413
    %v415 = vmul.f32 %v413, %v414
    %v416 = vsub.f32 1.0, %v415
    %v417 = vmul.f32 %v414, %v416
    %v418 = vadd.f32 %v414, %v417
    %vm419 = vweird.f32 %v413
    %vm420 = vweird.f32 %v414
    %vm421 = vmor %vm419, %vm420
    %v422 = vsel %vm421, %v414, %v418
    %v423 = vand.u32 2147483647, %v413
    %vm424 = vcmp.eq.f32.partialorder %v423, 8.507059e+37
    %v425 = vand.u32 %v413, 2147483648
    %v426 = vor.u32 1.1754944e-38, %v425
    %v427 = vsel %vm424, %v426, %v422
    %v428 = vmul.f32 1.0, %v427
    %v429 = vpack.c.bf16 %v428, %v428
    %430 = vmatpush.bf16.msra.mxu0 %v144
    %431 = vmatpush.bf16.msra.mxu0 %v143
    %432 = vmatpush.bf16.msra.mxu0 %v142
    %433 = vmatpush.bf16.msra.mxu0 %v141
    %434 = vmatpush.bf16.msra.mxu0 %v140
    %435 = vmatpush.bf16.msra.mxu0 %v139
    %436 = vmatpush.bf16.msra.mxu0 %v138
    %437 = vmatpush.bf16.msra.mxu0 %v137
    %438 = vmatmul.bf16.gmra.mxu0 %v429
    %v439 = vpop.f32.mrf.mxu0
    %v440 = vadd.f32 0.0, %v439
    %v441 = vpop.f32.mrf.mxu0
    %442 = vdwg.mxu0
    %v443 = vmul.f32 %v409, 0.9
    %v444 = vmul.f32 %v440, 0.1
    %v445 = vadd.f32 %v443, %v444
    %s446 = scalar_lea.vmem [#allocation4], 56
    %v447 = vld [vmem:[%s446] sm:$0xff]
    %v448 = vadd.f32 %v445, %v447
    %v449 = vsub.f32 0.0, %v448
    %v450 = vmul.f32 %v449, 1.442695
    %v451 = vpow.pop %v450
    %v452 = vadd.f32 %v451, 1.0
    %v453 = vrcp.pop %v452
    %v454 = vmul.f32 %v452, %v453
    %v455 = vsub.f32 1.0, %v454
    %v456 = vmul.f32 %v453, %v455
    %v457 = vadd.f32 %v453, %v456
    %vm458 = vweird.f32 %v452
    %vm459 = vweird.f32 %v453
    %vm460 = vmor %vm458, %vm459
    %v461 = vsel %vm460, %v453, %v457
    %v462 = vand.u32 2147483647, %v452
    %vm463 = vcmp.eq.f32.partialorder %v462, 8.507059e+37
    %v464 = vand.u32 %v452, 2147483648
    %v465 = vor.u32 1.1754944e-38, %v464
    %v466 = vsel %vm463, %v465, %v461
    %v467 = vmul.f32 1.0, %v466
    %s468 = scalar_lea.vmem [#allocation10], 24
    %469 = vst [vmem:[%s468] sm:$0xff] %v467
    %470 = vst [vmem:[#allocation2] sm:$0xff] %v448
    %471 = vst [vmem:[#allocation3] sm:$0xff] %v467
    // Predicated region
    $region30: #{tpu_custom_call.1} parent=1 // pred_check
      _
    $region31: #{tpu_custom_call.1} parent=1 // pred_check_branch
      %473 = sbr.rel (0) target = $region33
    $region32: #{tpu_custom_call.1} parent=1 // pred_region
      %475 = vsyncadd [#allocation6], 0
      %s476 = sshll.u32 [#allocation10], 4
      %s477 = int_to_ptr.vmem [resolvable:$true] %s476
      %s478 = sshll.u32 %s3, 4
      %s479 = int_to_ptr.hbm [resolvable:$true] %s478
      %484 = dma.vmem_to_hbm [thread:$0]  %s477, 512, %s479, [#allocation6], 128, 128, 8
    $region33: #{tpu_custom_call.1} parent=1 // pred_fallthru
      _
    // Predicated region
    $region34: #{tpu_custom_call.1} parent=1 // pred_check
      _
    $region35: #{tpu_custom_call.1} parent=1 // pred_check_branch
      %486 = sbr.rel (0) target = $region37
    $region36: #{tpu_custom_call.1} parent=1 // pred_region
      %488 = dma.done [#allocation6], 512
    $region37: #{tpu_custom_call.1} parent=1 // pred_fallthru
      _
    %489 = vsyncpa [#allocation5], 1
    %490 = vsyncpa [#allocation8], 1
    %491 = vsyncpa [#allocation6], 1

</llo_original>
